<compile_context>
chip_gen: v6e
topology: v6e:2x2x1
jax: 0.10.0
libtpu: 0.0.40
codegen_flags: <defaults>
</compile_context>

<pallas_src>
import jax
import jax.numpy as jnp
from jax.experimental import pallas as pl
from jax.experimental.pallas import tpu as pltpu


def ma_gating_kernel(x_ref, ea_ref, b_ref, o_ref):
    # x_ref/o_ref: (tb, tn); ea_ref/b_ref: (1, tn) f32 -> sublane-broadcast FMA.
    # Compute in f32 so a bf16 x path doesn't add an extra rounding of exp(a).
    x = x_ref[...].astype(jnp.float32)
    o_ref[...] = (x * ea_ref[...] + b_ref[...]).astype(o_ref.dtype)


def ma_gating(x, a, b, *, target_block_bytes=4 << 20, donate_x=False):
    """out = x * exp(a) + b, a/b of shape (S, D) broadcast over batch."""
    B, S, D = x.shape
    assert a.shape == (S, D) and b.shape == (S, D)
    N = S * D
    elem = x.dtype.itemsize

    # exp(a) hoisted to the wrapper: computed once by XLA on the tiny (S, D)
    # params; kept in f32 so the in-kernel FMA happens at full precision.
    ea2 = jnp.exp(a.astype(jnp.float32)).reshape(1, N)
    b2 = b.astype(jnp.float32).reshape(1, N)
    x2 = x.reshape(B, N)  # lane-dense flattened layout: last dim = S * D

    # Sublane packing: 8 rows for 4-byte dtypes, 16 for bf16, 32 for int8/fp8.
    pack = max(8, 32 // elem)
    tb_min = min(B, pack)

    if N * tb_min * elem <= target_block_bytes:
        # Full lane width fits: grow the batch tile to hit the byte budget.
        tn = N
        tb = max(tb_min, (target_block_bytes // (N * elem)) // pack * pack)
        tb = min(tb, B)
    else:
        # Wide lane axis: minimal batch tile, lane tile sized for the budget.
        tb = tb_min
        tn = max(128, (target_block_bytes // (tb * elem)) // 128 * 128)
        tn = min(tn, N)

    # Prefer a tb that divides B so the last batch tile isn't a ragged remainder.
    if 0 < tb < B and B % tb != 0:
        for cand in range(tb, pack - 1, -pack):
            if B % cand == 0:
                tb = cand
                break

    nj = pl.cdiv(N, tn)  # lane blocks  (outer grid axis)
    ni = pl.cdiv(B, tb)  # batch blocks (inner grid axis)

    # v7x has 2 TensorCores: make sure the parallel grid has >= 2 blocks.
    if nj * ni < 2:
        if tb >= 2 * pack:
            tb = (tb // 2) // pack * pack
        elif tn >= 256:
            tn = (tn // 2) // 128 * 128
        nj = pl.cdiv(N, tn)
        ni = pl.cdiv(B, tb)

    # Grid: lane axis OUTER, batch axis INNER.  ea/b block index depends only
    # on the lane axis -> constant across the inner batch sweep, so the
    # pipeline skips re-DMA of the params from HBM on every step.
    grid = (nj, ni)

    kwargs = {}
    if donate_x:
        kwargs["input_output_aliases"] = {0: 0}

    out2 = pl.pallas_call(
        ma_gating_kernel,
        out_shape=jax.ShapeDtypeStruct((B, N), x.dtype),
        grid=grid,
        in_specs=[
            pl.BlockSpec((tb, tn), lambda j, i: (i, j)),  # x
            pl.BlockSpec((1, tn), lambda j, i: (0, j)),   # exp(a): reused across batch sweep
            pl.BlockSpec((1, tn), lambda j, i: (0, j)),   # b:      reused across batch sweep
        ],
        out_specs=pl.BlockSpec((tb, tn), lambda j, i: (i, j)),
        compiler_params=pltpu.CompilerParams(
            dimension_semantics=("parallel", "parallel"),
            vmem_limit_bytes=32 << 20,
        ),
        cost_estimate=pl.CostEstimate(
            flops=2 * B * N,
            transcendentals=0,
            bytes_accessed=(2 * B * N + 2 * N) * elem,
        ),
        **kwargs,
    )(x2, ea2, b2)
    return out2.reshape(B, S, D)


if __name__ == "__main__":
    d_model = 128          # small, lane-aligned stand-in for the default 512
    seq = 64               # fixed by the module's parameter shape (64, d_model)
    batch = 2

    key = jax.random.PRNGKey(0)
    kx, ka, kb = jax.random.split(key, 3)

    x = jax.random.normal(kx, (batch, seq, d_model), dtype=jnp.float32)
    # Deterministic synthetic params (module init is zeros/ones; use small
    # random perturbations so the exp/mul/add path is actually exercised).
    a = 0.1 * jax.random.normal(ka, (seq, d_model), dtype=jnp.float32)
    b = jnp.ones((seq, d_model), dtype=jnp.float32) \
        + 0.1 * jax.random.normal(kb, (seq, d_model), dtype=jnp.float32)

    out = ma_gating(x, a, b)
    jax.block_until_ready(out)

    ref = x * jnp.exp(a)[None] + b[None]
    assert out.shape == (batch, seq, d_model)
    assert jnp.allclose(out, ref, atol=1e-5, rtol=1e-5)

    print("KERNEL_OK")
</pallas_src>

<mosaic_0001>
module attributes {stable_mosaic.version = 11 : i64} {
  func.func @ma_gating_kernel(%arg0: i32, %arg1: i32, %arg2: memref<2x4096xf32, #tpu.memory_space<vmem>>, %arg3: memref<1x4096xf32, #tpu.memory_space<vmem>>, %arg4: memref<1x4096xf32, #tpu.memory_space<vmem>>, %arg5: memref<2x4096xf32, #tpu.memory_space<vmem>>) attributes {dimension_semantics = [#tpu.dimension_semantics<parallel>, #tpu.dimension_semantics<parallel>], iteration_bounds = array<i64: 2, 1>, scalar_prefetch = 0 : i64, scratch_operands = 0 : i64, tpu.core_type = #tpu.core_type<tc>, window_params = [{transform_indices = @transform_0, window_bounds = array<i64: 2, 4096>}, {transform_indices = @transform_1, window_bounds = array<i64: 1, 4096>}, {transform_indices = @transform_2, window_bounds = array<i64: 1, 4096>}, {transform_indices = @transform_3, window_bounds = array<i64: 2, 4096>}]} {
    %c0 = arith.constant 0 : index
    %c0_0 = arith.constant 0 : index
    %0 = vector.load %arg2[%c0, %c0_0] : memref<2x4096xf32, #tpu.memory_space<vmem>>, vector<2x4096xf32>
    %c0_1 = arith.constant 0 : index
    %c0_2 = arith.constant 0 : index
    %1 = vector.load %arg3[%c0_1, %c0_2] : memref<1x4096xf32, #tpu.memory_space<vmem>>, vector<1x4096xf32>
    %2 = vector.broadcast %1 : vector<1x4096xf32> to vector<2x4096xf32>
    %3 = arith.mulf %0, %2 : vector<2x4096xf32>
    %c0_3 = arith.constant 0 : index
    %c0_4 = arith.constant 0 : index
    %4 = vector.load %arg4[%c0_3, %c0_4] : memref<1x4096xf32, #tpu.memory_space<vmem>>, vector<1x4096xf32>
    %5 = vector.broadcast %4 : vector<1x4096xf32> to vector<2x4096xf32>
    %6 = arith.addf %3, %5 : vector<2x4096xf32>
    %c0_5 = arith.constant 0 : index
    %c0_6 = arith.constant 0 : index
    %7 = vector.load %arg5[%c0_5, %c0_6] : memref<2x4096xf32, #tpu.memory_space<vmem>>, vector<2x4096xf32>
    tpu.vector_store %arg5[%c0_5, %c0_6], %6 {strides = array<i32>} : memref<2x4096xf32, #tpu.memory_space<vmem>>, vector<2x4096xf32>,
    return
  }
  func.func @transform_0(%arg0: i32, %arg1: i32) -> (i32, i32) {
    %c0_i32 = arith.constant 0 : i32
    return %arg1, %arg0 : i32, i32
  }
  func.func @transform_1(%arg0: i32, %arg1: i32) -> (i32, i32) {
    %c0_i32 = arith.constant 0 : i32
    %c0_i32_0 = arith.constant 0 : i32
    return %c0_i32, %arg0 : i32, i32
  }
  func.func @transform_2(%arg0: i32, %arg1: i32) -> (i32, i32) {
    %c0_i32 = arith.constant 0 : i32
    %c0_i32_0 = arith.constant 0 : i32
    return %c0_i32, %arg0 : i32, i32
  }
  func.func @transform_3(%arg0: i32, %arg1: i32) -> (i32, i32) {
    %c0_i32 = arith.constant 0 : i32
    return %arg1, %arg0 : i32, i32
  }
}

</mosaic_0001>

<llo_original>
// kernel: tpu_custom_call.1
$region0: #{tpu_custom_call.1}
  #allocation0 [shape = 'u32[]', space=smem, size = 0x4, offset = 0x4, fixed_abs, tag = 'smem constant byte address 0x4 - core index']
  #allocation1 [shape = 'u32[144,128]{1,0:T(1,128)}', space=vmem, size = 0x12000, scoped, tag = 'internal scratch']
  %s0 = inlined_call_operand.hbm [shape: f32[2,8192], index: 0, kind: input, shape index: {}]
  %s1 = inlined_call_operand.hbm [shape: f32[1,8192], index: 1, kind: input, shape index: {}]
  %s2 = inlined_call_operand.hbm [shape: f32[1,8192], index: 2, kind: input, shape index: {}]
  %s3 = inlined_call_operand.hbm [shape: f32[2,8192], index: 3, kind: output, shape index: {}]
  %s4 = sld [smem:[#allocation0]]
  $region57: #{tpu_custom_call.1} parent=0
    _
  %s6 = ssub.s32 1, %s4
  %s7 = scalar_select 0, %s6, %s4
  $region1: #{tpu_custom_call.1} parent=0
    #allocation2 [shape = 'u8[65536]{0}', space=vmem, size = 0x10000, scoped, tag = 'input window, operand 0']
    #allocation3 [shape = 's32[2]{0}', space=sflag, size = 0x8, scoped, tag = 'scoped memory for tpu_custom_call.1']
    #allocation4 [shape = 's32[2]{0}', space=sflag, size = 0x8, scoped, tag = 'scoped memory for tpu_custom_call.1']
    #allocation5 [shape = 'u8[32768]{0}', space=vmem, size = 0x8000, scoped, tag = 'input window, operand 1']
    #allocation6 [shape = 's32[2]{0}', space=sflag, size = 0x8, scoped, tag = 'scoped memory for tpu_custom_call.1']
    #allocation7 [shape = 'u8[32768]{0}', space=vmem, size = 0x8000, scoped, tag = 'input window, operand 2']
    #allocation8 [shape = 'u8[65536]{0}', space=vmem, size = 0x10000, scoped, tag = 'output window, operand 0']
    %8 = vsyncpa [#allocation3], 0
    %s9 = scalar_lea.sflag [#allocation3], 1
    %10 = vsyncpa %s9, 0
    %11 = vsyncpa [#allocation6], 0
    %s12 = scalar_lea.sflag [#allocation6], 1
    %13 = vsyncpa %s12, 0
    %14 = vsyncpa [#allocation4], 0
    %s15 = scalar_lea.sflag [#allocation4], 1
    %16 = vsyncpa %s15, 0
    loop: start=0, step=1, limit=4
    $region2: #{tpu_custom_call.1} parent=1 // loop_pre_header
      _
    $region3: #{tpu_custom_call.1} parent=1 // loop_header
      %s18 = sphi 0, %s22
      %p19 = scmp.ge.s32.totalorder %s18, 4
      %s25 = sphi 0, %s37
      %s26 = sphi 0, %s33
      %s27 = sphi 0, %s25
      %s28 = sphi 0, %s26
      %s29 = sphi 0, %s27
      %s30 = sphi 0, %s28
      %s42 = sphi 0, %s44
      %s45 = sphi 0, %s42
      %s46 = sphi 0, %s45
      %s62 = sphi 0, %s46
      %s68 = sphi 0, %s70
      %s71 = sphi 0, %s68
      %s72 = sphi 0, %s71
      %s88 = sphi 0, %s72
      %s94 = sphi 0, %s96
      %s97 = sphi 0, %s94
      %s98 = sphi 0, %s97
      %s114 = sphi 0, %s98
      %s122 = sphi 0, %s124
      %s125 = sphi 0, %s122
      %s126 = sphi 0, %s125
      %s142 = sphi 0, %s126
    $region4: #{tpu_custom_call.1} parent=1 // loop_header_branch
      %21 = sbr.rel (%p19) target = $region8
    $region5: #{tpu_custom_call.1} parent=1 // loop_body
      %s23 = ssub.s32 %s18, 1
      %s24 = ssub.s32 %s18, 2
      %s31 = sadd.s32 1, %s26
      %p32 = scmp.ge.s32.totalorder %s31, 1
      %s33 = scalar_select %p32, 0, %s31
      %s34 = sadd.s32 1, %s25
      %s35 = scalar_select %p32, %s34, %s25
      %p36 = scmp.ge.s32.totalorder %s35, 2
      %s37 = scalar_select %p36, 0, %s35
      %s38 = ssub.s32 %s26, %s33
      %s39 = ssub.s32 %s25, %s37
      %s40 = sor.u32 %s38, %s39
      %p41 = scmp.eq.s32.totalorder %s40, 0
      %s43 = sadd.s32 %s42, 1
      %s44 = scalar_select %p41, %s42, %s43
      %p47 = pneg %p41
      %p48 = scmp.eq.s32.totalorder %s18, 1
      %p49 = por %p47, %p48
      %p50 = scmp.ne.s32.totalorder %s42, %s45
      %p51 = scmp.eq.s32.totalorder %s18, 0
      %p52 = por %p50, %p51
      %p53 = scmp.ne.s32.totalorder %s42, %s45
      %p54 = scmp.eq.s32.totalorder %s23, 1
      %p55 = por %p53, %p54
      %p56 = scmp.ne.s32.totalorder %s45, %s46
      %p57 = scmp.eq.s32.totalorder %s23, 0
      %p58 = por %p56, %p57
      %p59 = scmp.ne.s32.totalorder %s45, %s46
      %p60 = scmp.eq.s32.totalorder %s24, 1
      %p61 = por %p59, %p60
      %p63 = scmp.ne.s32.totalorder %s46, %s62
      %p64 = scmp.eq.s32.totalorder %s24, 0
      %p65 = por %p63, %p64
      %s66 = ssub.s32 %s25, %s37
      %p67 = scmp.eq.s32.totalorder %s66, 0
      %s69 = sadd.s32 %s68, 1
      %s70 = scalar_select %p67, %s68, %s69
      %p73 = pneg %p67
      %p74 = scmp.eq.s32.totalorder %s18, 1
      %p75 = por %p73, %p74
      %p76 = scmp.ne.s32.totalorder %s68, %s71
      %p77 = scmp.eq.s32.totalorder %s18, 0
      %p78 = por %p76, %p77
      %p79 = scmp.ne.s32.totalorder %s68, %s71
      %p80 = scmp.eq.s32.totalorder %s23, 1
      %p81 = por %p79, %p80
      %p82 = scmp.ne.s32.totalorder %s71, %s72
      %p83 = scmp.eq.s32.totalorder %s23, 0
      %p84 = por %p82, %p83
      %p85 = scmp.ne.s32.totalorder %s71, %s72
      %p86 = scmp.eq.s32.totalorder %s24, 1
      %p87 = por %p85, %p86
      %p89 = scmp.ne.s32.totalorder %s72, %s88
      %p90 = scmp.eq.s32.totalorder %s24, 0
      %p91 = por %p89, %p90
      %s92 = ssub.s32 %s25, %s37
      %p93 = scmp.eq.s32.totalorder %s92, 0
      %s95 = sadd.s32 %s94, 1
      %s96 = scalar_select %p93, %s94, %s95
      %p99 = pneg %p93
      %p100 = scmp.eq.s32.totalorder %s18, 1
      %p101 = por %p99, %p100
      %p102 = scmp.ne.s32.totalorder %s94, %s97
      %p103 = scmp.eq.s32.totalorder %s18, 0
      %p104 = por %p102, %p103
      %p105 = scmp.ne.s32.totalorder %s94, %s97
      %p106 = scmp.eq.s32.totalorder %s23, 1
      %p107 = por %p105, %p106
      %p108 = scmp.ne.s32.totalorder %s97, %s98
      %p109 = scmp.eq.s32.totalorder %s23, 0
      %p110 = por %p108, %p109
      %p111 = scmp.ne.s32.totalorder %s97, %s98
      %p112 = scmp.eq.s32.totalorder %s24, 1
      %p113 = por %p111, %p112
      %p115 = scmp.ne.s32.totalorder %s98, %s114
      %p116 = scmp.eq.s32.totalorder %s24, 0
      %p117 = por %p115, %p116
      %s118 = ssub.s32 %s26, %s33
      %s119 = ssub.s32 %s25, %s37
      %s120 = sor.u32 %s118, %s119
      %p121 = scmp.eq.s32.totalorder %s120, 0
      %s123 = sadd.s32 %s122, 1
      %s124 = scalar_select %p121, %s122, %s123
      %p127 = pneg %p121
      %p128 = scmp.eq.s32.totalorder %s18, 1
      %p129 = por %p127, %p128
      %p130 = scmp.ne.s32.totalorder %s122, %s125
      %p131 = scmp.eq.s32.totalorder %s18, 0
      %p132 = por %p130, %p131
      %p133 = scmp.ne.s32.totalorder %s122, %s125
      %p134 = scmp.eq.s32.totalorder %s23, 1
      %p135 = por %p133, %p134
      %p136 = scmp.ne.s32.totalorder %s125, %s126
      %p137 = scmp.eq.s32.totalorder %s23, 0
      %p138 = por %p136, %p137
      %p139 = scmp.ne.s32.totalorder %s125, %s126
      %p140 = scmp.eq.s32.totalorder %s24, 1
      %p141 = por %p139, %p140
      %p143 = scmp.ne.s32.totalorder %s126, %s142
      %p144 = scmp.eq.s32.totalorder %s24, 0
      %p145 = por %p143, %p144
      %p146 = scmp.le.s32.totalorder 1, %s18
      %p147 = scmp.lt.s32.totalorder %s18, 3
      %p148 = pnand %p146, %p147
      %p149 = pneg %p148
      // Predicated region
      $region9: #{tpu_custom_call.1} parent=5 // pred_check
        _
      $region10: #{tpu_custom_call.1} parent=5 // pred_check_branch
        %151 = sbr.rel (%p148) target = $region12
      $region11: #{tpu_custom_call.1} parent=5 // pred_region
        %s152 = ssub.s32 %s18, 1
      $region12: #{tpu_custom_call.1} parent=5 // pred_fallthru
        _
      %p153 = scmp.lt.s32.totalorder %s18, 2
      // Predicated region
      $region13: #{tpu_custom_call.1} parent=5 // pred_check
        %p154 = pneg %p153
      $region14: #{tpu_custom_call.1} parent=5 // pred_check_branch
        %156 = sbr.rel (%p154) target = $region16
      $region15: #{tpu_custom_call.1} parent=5 // pred_region
        // Predicated region
        $region17: #{tpu_custom_call.1} parent=15 // pred_check
          %p157 = pneg %p52
        $region18: #{tpu_custom_call.1} parent=15 // pred_check_branch
          %159 = sbr.rel (%p157) target = $region20
        $region19: #{tpu_custom_call.1} parent=15 // pred_region
          %s160 = sand.u32 %s42, 1
          %s161 = scalar_lea.sflag [#allocation3], %s160
          %s162 = sand.u32 %s42, 1
          %s163 = smul.addr %s162, 64
          %s164 = scalar_lea.vmem [#allocation2], %s163
          %s165 = smul.u32 32, %s25
          %s167 = ssub.s32 1024, 1024
          %168 = vsyncadd %s161, %s167
          %s169 = smul.addr %s26, 64
          %s170 = sadd.s32 %s165, %s169
          %s171 = smul.addr %s170, 32
          %s172 = scalar_lea.hbm %s0, %s171
          %s174 = sshll.u32 %s164, 4
          %s175 = int_to_ptr.vmem [resolvable:$true] %s174
          %177 = dma.hbm_to_vmem [thread:$0]  %s172, 1024, %s175, %s161
        $region20: #{tpu_custom_call.1} parent=15 // pred_fallthru
          _
        // Predicated region
        $region21: #{tpu_custom_call.1} parent=15 // pred_check
          %p178 = pneg %p78
        $region22: #{tpu_custom_call.1} parent=15 // pred_check_branch
          %180 = sbr.rel (%p178) target = $region24
        $region23: #{tpu_custom_call.1} parent=15 // pred_region
          %s181 = sand.u32 %s18, 1
          %s182 = scalar_lea.sflag [#allocation6], %s181
          %s183 = sand.u32 %s68, 1
          %s184 = smul.addr %s183, 32
          %s185 = scalar_lea.vmem [#allocation5], %s184
          %s186 = smul.u32 32, %s25
          %s188 = ssub.s32 512, 512
          %189 = vsyncadd %s182, %s188
          %s190 = smul.addr %s186, 16
          %s191 = scalar_lea.hbm %s1, %s190
          %s193 = sshll.u32 %s185, 4
          %s194 = int_to_ptr.vmem [resolvable:$true] %s193
          %196 = dma.hbm_to_vmem [thread:$0]  %s191, 512, %s194, %s182
        $region24: #{tpu_custom_call.1} parent=15 // pred_fallthru
          _
        // Predicated region
        $region25: #{tpu_custom_call.1} parent=15 // pred_check
          %p197 = pneg %p104
        $region26: #{tpu_custom_call.1} parent=15 // pred_check_branch
          %199 = sbr.rel (%p197) target = $region28
        $region27: #{tpu_custom_call.1} parent=15 // pred_region
          %s200 = sand.u32 %s18, 1
          %s201 = scalar_lea.sflag [#allocation6], %s200
          %s202 = sand.u32 %s94, 1
          %s203 = smul.addr %s202, 32
          %s204 = scalar_lea.vmem [#allocation7], %s203
          %s205 = smul.u32 32, %s25
          %s207 = ssub.s32 512, 512
          %208 = vsyncadd %s201, %s207
          %s209 = smul.addr %s205, 16
          %s210 = scalar_lea.hbm %s2, %s209
          %s212 = sshll.u32 %s204, 4
          %s213 = int_to_ptr.vmem [resolvable:$true] %s212
          %215 = dma.hbm_to_vmem [thread:$0]  %s210, 512, %s213, %s201
        $region28: #{tpu_custom_call.1} parent=15 // pred_fallthru
          _
      $region16: #{tpu_custom_call.1} parent=5 // pred_fallthru
        _
      %p216 = scmp.le.s32.totalorder 1, %s18
      %p217 = scmp.lt.s32.totalorder %s18, 3
      %p218 = pnand %p216, %p217
      %p219 = pneg %p218
      // Predicated region
      $region29: #{tpu_custom_call.1} parent=5 // pred_check
        _
      $region30: #{tpu_custom_call.1} parent=5 // pred_check_branch
        %221 = sbr.rel (%p218) target = $region32
      $region31: #{tpu_custom_call.1} parent=5 // pred_region
        %s222 = ssub.s32 %s18, 1
        %s223 = sand.u32 %s45, 1
        %s224 = scalar_lea.sflag [#allocation3], %s223
        %s225 = sand.u32 %s45, 1
        %s226 = smul.addr %s225, 64
        %s227 = scalar_lea.vmem [#allocation2], %s226
        // Predicated region
        $region33: #{tpu_custom_call.1} parent=31 // pred_check
          %p228 = pneg %p58
        $region34: #{tpu_custom_call.1} parent=31 // pred_check_branch
          %230 = sbr.rel (%p228) target = $region36
        $region35: #{tpu_custom_call.1} parent=31 // pred_region
          %231 = dma.done %s224, 1024
        $region36: #{tpu_custom_call.1} parent=31 // pred_fallthru
          _
        %s232 = sand.u32 %s23, 1
        %s233 = scalar_lea.sflag [#allocation6], %s232
        %s234 = sand.u32 %s71, 1
        %s235 = smul.addr %s234, 32
        %s236 = scalar_lea.vmem [#allocation5], %s235
        // Predicated region
        $region37: #{tpu_custom_call.1} parent=31 // pred_check
          %p237 = pneg %p84
        $region38: #{tpu_custom_call.1} parent=31 // pred_check_branch
          %239 = sbr.rel (%p237) target = $region40
        $region39: #{tpu_custom_call.1} parent=31 // pred_region
          %240 = dma.done %s233, 512
        $region40: #{tpu_custom_call.1} parent=31 // pred_fallthru
          _
        %s241 = sand.u32 %s23, 1
        %s242 = scalar_lea.sflag [#allocation6], %s241
        %s243 = sand.u32 %s97, 1
        %s244 = smul.addr %s243, 32
        %s245 = scalar_lea.vmem [#allocation7], %s244
        // Predicated region
        $region41: #{tpu_custom_call.1} parent=31 // pred_check
          %p246 = pneg %p110
        $region42: #{tpu_custom_call.1} parent=31 // pred_check_branch
          %248 = sbr.rel (%p246) target = $region44
        $region43: #{tpu_custom_call.1} parent=31 // pred_region
          %249 = dma.done %s242, 512
        $region44: #{tpu_custom_call.1} parent=31 // pred_fallthru
          _
        %s250 = sand.u32 %s45, 1
        %s251 = scalar_lea.sflag [#allocation3], %s250
        %s252 = sand.u32 %s45, 1
        %s253 = smul.addr %s252, 64
        %s254 = scalar_lea.vmem [#allocation2], %s253
        %p255 = pneg %p58
        %p256 = pneg %p55
        %s257 = sand.u32 %s23, 1
        %s258 = scalar_lea.sflag [#allocation6], %s257
        %s259 = sand.u32 %s71, 1
        %s260 = smul.addr %s259, 32
        %s261 = scalar_lea.vmem [#allocation5], %s260
        %p262 = pneg %p84
        %p263 = pneg %p81
        %s264 = sand.u32 %s23, 1
        %s265 = scalar_lea.sflag [#allocation6], %s264
        %s266 = sand.u32 %s97, 1
        %s267 = smul.addr %s266, 32
        %s268 = scalar_lea.vmem [#allocation7], %s267
        %p269 = pneg %p110
        %p270 = pneg %p107
        %p271 = pneg %p138
        %p272 = pneg %p135
        %s273 = sand.u32 %s125, 1
        %s274 = scalar_lea.sflag [#allocation4], %s273
        %s275 = sand.u32 %s125, 1
        %s276 = smul.addr %s275, 64
        %s277 = scalar_lea.vmem [#allocation8], %s276
        %s278 = smul.u32 32, %s27
        %s279 = smul.u32 32, %s27
        %s280 = smul.u32 32, %s27
        %s281 = smul.u32 32, %s27
        %v282 = vld [vmem:[%s227] sm:$0xff]
        %v283 = vld [vmem:[%s227 + $0x8] sm:$0xff]
        %v284 = vld [vmem:[%s227 + $0x10] sm:$0xff]
        %v285 = vld [vmem:[%s227 + $0x18] sm:$0xff]
        %v286 = vld [vmem:[%s227 + $0x20] sm:$0xff]
        %v287 = vld [vmem:[%s227 + $0x28] sm:$0xff]
        %v288 = vld [vmem:[%s227 + $0x30] sm:$0xff]
        %v289 = vld [vmem:[%s227 + $0x38] sm:$0xff]
        %v290 = vld [vmem:[%s236] sm:$0xff]
        %v291 = vld [vmem:[%s236 + $0x8] sm:$0xff]
        %v292 = vld [vmem:[%s236 + $0x10] sm:$0xff]
        %v293 = vld [vmem:[%s236 + $0x18] sm:$0xff]
        %v298 = vlaneseq
        %v299 = vshrl.u32 %v298, 7
        %v300 = vsub.s32 0, %v299
        %v301 = vrot.slane %v290, %v300
        %v302 = vlaneseq
        %v303 = vshrl.u32 %v302, 7
        %v304 = vsub.s32 1, %v303
        %v305 = vrot.slane %v290, %v304
        %v306 = vlaneseq
        %v307 = vshrl.u32 %v306, 7
        %v308 = vsub.s32 2, %v307
        %v309 = vrot.slane %v290, %v308
        %v310 = vlaneseq
        %v311 = vshrl.u32 %v310, 7
        %v312 = vsub.s32 3, %v311
        %v313 = vrot.slane %v290, %v312
        %v314 = vlaneseq
        %v315 = vshrl.u32 %v314, 7
        %v316 = vsub.s32 4, %v315
        %v317 = vrot.slane %v290, %v316
        %v318 = vlaneseq
        %v319 = vshrl.u32 %v318, 7
        %v320 = vsub.s32 5, %v319
        %v321 = vrot.slane %v290, %v320
        %v322 = vlaneseq
        %v323 = vshrl.u32 %v322, 7
        %v324 = vsub.s32 6, %v323
        %v325 = vrot.slane %v290, %v324
        %v326 = vlaneseq
        %v327 = vshrl.u32 %v326, 7
        %v328 = vsub.s32 7, %v327
        %v329 = vrot.slane %v290, %v328
        %v330 = vlaneseq
        %v331 = vshrl.u32 %v330, 7
        %v332 = vsub.s32 0, %v331
        %v333 = vrot.slane %v291, %v332
        %v334 = vlaneseq
        %v335 = vshrl.u32 %v334, 7
        %v336 = vsub.s32 1, %v335
        %v337 = vrot.slane %v291, %v336
        %v338 = vlaneseq
        %v339 = vshrl.u32 %v338, 7
        %v340 = vsub.s32 2, %v339
        %v341 = vrot.slane %v291, %v340
        %v342 = vlaneseq
        %v343 = vshrl.u32 %v342, 7
        %v344 = vsub.s32 3, %v343
        %v345 = vrot.slane %v291, %v344
        %v346 = vlaneseq
        %v347 = vshrl.u32 %v346, 7
        %v348 = vsub.s32 4, %v347
        %v349 = vrot.slane %v291, %v348
        %v350 = vlaneseq
        %v351 = vshrl.u32 %v350, 7
        %v352 = vsub.s32 5, %v351
        %v353 = vrot.slane %v291, %v352
        %v354 = vlaneseq
        %v355 = vshrl.u32 %v354, 7
        %v356 = vsub.s32 6, %v355
        %v357 = vrot.slane %v291, %v356
        %v358 = vlaneseq
        %v359 = vshrl.u32 %v358, 7
        %v360 = vsub.s32 7, %v359
        %v361 = vrot.slane %v291, %v360
        %v362 = vlaneseq
        %v363 = vshrl.u32 %v362, 7
        %v364 = vsub.s32 0, %v363
        %v365 = vrot.slane %v292, %v364
        %v366 = vlaneseq
        %v367 = vshrl.u32 %v366, 7
        %v368 = vsub.s32 1, %v367
        %v369 = vrot.slane %v292, %v368
        %v370 = vlaneseq
        %v371 = vshrl.u32 %v370, 7
        %v372 = vsub.s32 2, %v371
        %v373 = vrot.slane %v292, %v372
        %v374 = vlaneseq
        %v375 = vshrl.u32 %v374, 7
        %v376 = vsub.s32 3, %v375
        %v377 = vrot.slane %v292, %v376
        %v378 = vlaneseq
        %v379 = vshrl.u32 %v378, 7
        %v380 = vsub.s32 4, %v379
        %v381 = vrot.slane %v292, %v380
        %v382 = vlaneseq
        %v383 = vshrl.u32 %v382, 7
        %v384 = vsub.s32 5, %v383
        %v385 = vrot.slane %v292, %v384
        %v386 = vlaneseq
        %v387 = vshrl.u32 %v386, 7
        %v388 = vsub.s32 6, %v387
        %v389 = vrot.slane %v292, %v388
        %v390 = vlaneseq
        %v391 = vshrl.u32 %v390, 7
        %v392 = vsub.s32 7, %v391
        %v393 = vrot.slane %v292, %v392
        %v394 = vlaneseq
        %v395 = vshrl.u32 %v394, 7
        %v396 = vsub.s32 0, %v395
        %v397 = vrot.slane %v293, %v396
        %v398 = vlaneseq
        %v399 = vshrl.u32 %v398, 7
        %v400 = vsub.s32 1, %v399
        %v401 = vrot.slane %v293, %v400
        %v402 = vlaneseq
        %v403 = vshrl.u32 %v402, 7
        %v404 = vsub.s32 2, %v403
        %v405 = vrot.slane %v293, %v404
        %v406 = vlaneseq
        %v407 = vshrl.u32 %v406, 7
        %v408 = vsub.s32 3, %v407
        %v409 = vrot.slane %v293, %v408
        %v410 = vlaneseq
        %v411 = vshrl.u32 %v410, 7
        %v412 = vsub.s32 4, %v411
        %v413 = vrot.slane %v293, %v412
        %v414 = vlaneseq
        %v415 = vshrl.u32 %v414, 7
        %v416 = vsub.s32 5, %v415
        %v417 = vrot.slane %v293, %v416
        %v418 = vlaneseq
        %v419 = vshrl.u32 %v418, 7
        %v420 = vsub.s32 6, %v419
        %v421 = vrot.slane %v293, %v420
        %v422 = vlaneseq
        %v423 = vshrl.u32 %v422, 7
        %v424 = vsub.s32 7, %v423
        %v425 = vrot.slane %v293, %v424
        %v426 = vcombine.low %v301, %v305
        %v427 = vcombine.low %v309, %v313
        %v429 = vunpack.c.l.s4 1983009808
        %v430 = vunpack.c.0.s8 %v429
        %v431 = vlaneseq
        %v432 = vshrl.u32 %v431, 7
        %v433 = vsub.s32 %v430, %v432
        %v434 = vrot.slane %v426, %v433
        %v436 = vunpack.c.l.s4 1983009808
        %v437 = vunpack.c.0.s8 %v436
        %v438 = vlaneseq
        %v439 = vshrl.u32 %v438, 7
        %v440 = vsub.s32 %v437, %v439
        %v441 = vrot.slane %v427, %v440
        %v442 = vcombine.low %v434, %v441
        %v443 = vcombine.low %v317, %v321
        %v444 = vcombine.low %v325, %v329
        %v446 = vunpack.c.l.s4 1983009808
        %v447 = vunpack.c.0.s8 %v446
        %v448 = vlaneseq
        %v449 = vshrl.u32 %v448, 7
        %v450 = vsub.s32 %v447, %v449
        %v451 = vrot.slane %v443, %v450
        %v453 = vunpack.c.l.s4 1983009808
        %v454 = vunpack.c.0.s8 %v453
        %v455 = vlaneseq
        %v456 = vshrl.u32 %v455, 7
        %v457 = vsub.s32 %v454, %v456
        %v458 = vrot.slane %v444, %v457
        %v459 = vcombine.low %v451, %v458
        %v460 = vcombine.low %v333, %v337
        %v461 = vcombine.low %v341, %v345
        %v463 = vunpack.c.l.s4 1983009808
        %v464 = vunpack.c.0.s8 %v463
        %v465 = vlaneseq
        %v466 = vshrl.u32 %v465, 7
        %v467 = vsub.s32 %v464, %v466
        %v468 = vrot.slane %v460, %v467
        %v470 = vunpack.c.l.s4 1983009808
        %v471 = vunpack.c.0.s8 %v470
        %v472 = vlaneseq
        %v473 = vshrl.u32 %v472, 7
        %v474 = vsub.s32 %v471, %v473
        %v475 = vrot.slane %v461, %v474
        %v476 = vcombine.low %v468, %v475
        %v477 = vcombine.low %v349, %v353
        %v478 = vcombine.low %v357, %v361
        %v480 = vunpack.c.l.s4 1983009808
        %v481 = vunpack.c.0.s8 %v480
        %v482 = vlaneseq
        %v483 = vshrl.u32 %v482, 7
        %v484 = vsub.s32 %v481, %v483
        %v485 = vrot.slane %v477, %v484
        %v487 = vunpack.c.l.s4 1983009808
        %v488 = vunpack.c.0.s8 %v487
        %v489 = vlaneseq
        %v490 = vshrl.u32 %v489, 7
        %v491 = vsub.s32 %v488, %v490
        %v492 = vrot.slane %v478, %v491
        %v493 = vcombine.low %v485, %v492
        %v494 = vcombine.low %v365, %v369
        %v495 = vcombine.low %v373, %v377
        %v497 = vunpack.c.l.s4 1983009808
        %v498 = vunpack.c.0.s8 %v497
        %v499 = vlaneseq
        %v500 = vshrl.u32 %v499, 7
        %v501 = vsub.s32 %v498, %v500
        %v502 = vrot.slane %v494, %v501
        %v504 = vunpack.c.l.s4 1983009808
        %v505 = vunpack.c.0.s8 %v504
        %v506 = vlaneseq
        %v507 = vshrl.u32 %v506, 7
        %v508 = vsub.s32 %v505, %v507
        %v509 = vrot.slane %v495, %v508
        %v510 = vcombine.low %v502, %v509
        %v511 = vcombine.low %v381, %v385
        %v512 = vcombine.low %v389, %v393
        %v514 = vunpack.c.l.s4 1983009808
        %v515 = vunpack.c.0.s8 %v514
        %v516 = vlaneseq
        %v517 = vshrl.u32 %v516, 7
        %v518 = vsub.s32 %v515, %v517
        %v519 = vrot.slane %v511, %v518
        %v521 = vunpack.c.l.s4 1983009808
        %v522 = vunpack.c.0.s8 %v521
        %v523 = vlaneseq
        %v524 = vshrl.u32 %v523, 7
        %v525 = vsub.s32 %v522, %v524
        %v526 = vrot.slane %v512, %v525
        %v527 = vcombine.low %v519, %v526
        %v528 = vcombine.low %v397, %v401
        %v529 = vcombine.low %v405, %v409
        %v531 = vunpack.c.l.s4 1983009808
        %v532 = vunpack.c.0.s8 %v531
        %v533 = vlaneseq
        %v534 = vshrl.u32 %v533, 7
        %v535 = vsub.s32 %v532, %v534
        %v536 = vrot.slane %v528, %v535
        %v538 = vunpack.c.l.s4 1983009808
        %v539 = vunpack.c.0.s8 %v538
        %v540 = vlaneseq
        %v541 = vshrl.u32 %v540, 7
        %v542 = vsub.s32 %v539, %v541
        %v543 = vrot.slane %v529, %v542
        %v544 = vcombine.low %v536, %v543
        %v545 = vcombine.low %v413, %v417
        %v546 = vcombine.low %v421, %v425
        %v548 = vunpack.c.l.s4 1983009808
        %v549 = vunpack.c.0.s8 %v548
        %v550 = vlaneseq
        %v551 = vshrl.u32 %v550, 7
        %v552 = vsub.s32 %v549, %v551
        %v553 = vrot.slane %v545, %v552
        %v555 = vunpack.c.l.s4 1983009808
        %v556 = vunpack.c.0.s8 %v555
        %v557 = vlaneseq
        %v558 = vshrl.u32 %v557, 7
        %v559 = vsub.s32 %v556, %v558
        %v560 = vrot.slane %v546, %v559
        %v561 = vcombine.low %v553, %v560
        %v570 = vmul.f32 %v282, %v442
        %v571 = vmul.f32 %v283, %v459
        %v572 = vmul.f32 %v284, %v476
        %v573 = vmul.f32 %v285, %v493
        %v574 = vmul.f32 %v286, %v510
        %v575 = vmul.f32 %v287, %v527
        %v576 = vmul.f32 %v288, %v544
        %v577 = vmul.f32 %v289, %v561
        %v578 = vld [vmem:[%s245] sm:$0xff]
        %v579 = vld [vmem:[%s245 + $0x8] sm:$0xff]
        %v580 = vld [vmem:[%s245 + $0x10] sm:$0xff]
        %v581 = vld [vmem:[%s245 + $0x18] sm:$0xff]
        %v586 = vlaneseq
        %v587 = vshrl.u32 %v586, 7
        %v588 = vsub.s32 0, %v587
        %v589 = vrot.slane %v578, %v588
        %v590 = vlaneseq
        %v591 = vshrl.u32 %v590, 7
        %v592 = vsub.s32 1, %v591
        %v593 = vrot.slane %v578, %v592
        %v594 = vlaneseq
        %v595 = vshrl.u32 %v594, 7
        %v596 = vsub.s32 2, %v595
        %v597 = vrot.slane %v578, %v596
        %v598 = vlaneseq
        %v599 = vshrl.u32 %v598, 7
        %v600 = vsub.s32 3, %v599
        %v601 = vrot.slane %v578, %v600
        %v602 = vlaneseq
        %v603 = vshrl.u32 %v602, 7
        %v604 = vsub.s32 4, %v603
        %v605 = vrot.slane %v578, %v604
        %v606 = vlaneseq
        %v607 = vshrl.u32 %v606, 7
        %v608 = vsub.s32 5, %v607
        %v609 = vrot.slane %v578, %v608
        %v610 = vlaneseq
        %v611 = vshrl.u32 %v610, 7
        %v612 = vsub.s32 6, %v611
        %v613 = vrot.slane %v578, %v612
        %v614 = vlaneseq
        %v615 = vshrl.u32 %v614, 7
        %v616 = vsub.s32 7, %v615
        %v617 = vrot.slane %v578, %v616
        %v618 = vlaneseq
        %v619 = vshrl.u32 %v618, 7
        %v620 = vsub.s32 0, %v619
        %v621 = vrot.slane %v579, %v620
        %v622 = vlaneseq
        %v623 = vshrl.u32 %v622, 7
        %v624 = vsub.s32 1, %v623
        %v625 = vrot.slane %v579, %v624
        %v626 = vlaneseq
        %v627 = vshrl.u32 %v626, 7
        %v628 = vsub.s32 2, %v627
        %v629 = vrot.slane %v579, %v628
        %v630 = vlaneseq
        %v631 = vshrl.u32 %v630, 7
        %v632 = vsub.s32 3, %v631
        %v633 = vrot.slane %v579, %v632
        %v634 = vlaneseq
        %v635 = vshrl.u32 %v634, 7
        %v636 = vsub.s32 4, %v635
        %v637 = vrot.slane %v579, %v636
        %v638 = vlaneseq
        %v639 = vshrl.u32 %v638, 7
        %v640 = vsub.s32 5, %v639
        %v641 = vrot.slane %v579, %v640
        %v642 = vlaneseq
        %v643 = vshrl.u32 %v642, 7
        %v644 = vsub.s32 6, %v643
        %v645 = vrot.slane %v579, %v644
        %v646 = vlaneseq
        %v647 = vshrl.u32 %v646, 7
        %v648 = vsub.s32 7, %v647
        %v649 = vrot.slane %v579, %v648
        %v650 = vlaneseq
        %v651 = vshrl.u32 %v650, 7
        %v652 = vsub.s32 0, %v651
        %v653 = vrot.slane %v580, %v652
        %v654 = vlaneseq
        %v655 = vshrl.u32 %v654, 7
        %v656 = vsub.s32 1, %v655
        %v657 = vrot.slane %v580, %v656
        %v658 = vlaneseq
        %v659 = vshrl.u32 %v658, 7
        %v660 = vsub.s32 2, %v659
        %v661 = vrot.slane %v580, %v660
        %v662 = vlaneseq
        %v663 = vshrl.u32 %v662, 7
        %v664 = vsub.s32 3, %v663
        %v665 = vrot.slane %v580, %v664
        %v666 = vlaneseq
        %v667 = vshrl.u32 %v666, 7
        %v668 = vsub.s32 4, %v667
        %v669 = vrot.slane %v580, %v668
        %v670 = vlaneseq
        %v671 = vshrl.u32 %v670, 7
        %v672 = vsub.s32 5, %v671
        %v673 = vrot.slane %v580, %v672
        %v674 = vlaneseq
        %v675 = vshrl.u32 %v674, 7
        %v676 = vsub.s32 6, %v675
        %v677 = vrot.slane %v580, %v676
        %v678 = vlaneseq
        %v679 = vshrl.u32 %v678, 7
        %v680 = vsub.s32 7, %v679
        %v681 = vrot.slane %v580, %v680
        %v682 = vlaneseq
        %v683 = vshrl.u32 %v682, 7
        %v684 = vsub.s32 0, %v683
        %v685 = vrot.slane %v581, %v684
        %v686 = vlaneseq
        %v687 = vshrl.u32 %v686, 7
        %v688 = vsub.s32 1, %v687
        %v689 = vrot.slane %v581, %v688
        %v690 = vlaneseq
        %v691 = vshrl.u32 %v690, 7
        %v692 = vsub.s32 2, %v691
        %v693 = vrot.slane %v581, %v692
        %v694 = vlaneseq
        %v695 = vshrl.u32 %v694, 7
        %v696 = vsub.s32 3, %v695
        %v697 = vrot.slane %v581, %v696
        %v698 = vlaneseq
        %v699 = vshrl.u32 %v698, 7
        %v700 = vsub.s32 4, %v699
        %v701 = vrot.slane %v581, %v700
        %v702 = vlaneseq
        %v703 = vshrl.u32 %v702, 7
        %v704 = vsub.s32 5, %v703
        %v705 = vrot.slane %v581, %v704
        %v706 = vlaneseq
        %v707 = vshrl.u32 %v706, 7
        %v708 = vsub.s32 6, %v707
        %v709 = vrot.slane %v581, %v708
        %v710 = vlaneseq
        %v711 = vshrl.u32 %v710, 7
        %v712 = vsub.s32 7, %v711
        %v713 = vrot.slane %v581, %v712
        %v714 = vcombine.low %v589, %v593
        %v715 = vcombine.low %v597, %v601
        %v717 = vunpack.c.l.s4 1983009808
        %v718 = vunpack.c.0.s8 %v717
        %v719 = vlaneseq
        %v720 = vshrl.u32 %v719, 7
        %v721 = vsub.s32 %v718, %v720
        %v722 = vrot.slane %v714, %v721
        %v724 = vunpack.c.l.s4 1983009808
        %v725 = vunpack.c.0.s8 %v724
        %v726 = vlaneseq
        %v727 = vshrl.u32 %v726, 7
        %v728 = vsub.s32 %v725, %v727
        %v729 = vrot.slane %v715, %v728
        %v730 = vcombine.low %v722, %v729
        %v731 = vcombine.low %v605, %v609
        %v732 = vcombine.low %v613, %v617
        %v734 = vunpack.c.l.s4 1983009808
        %v735 = vunpack.c.0.s8 %v734
        %v736 = vlaneseq
        %v737 = vshrl.u32 %v736, 7
        %v738 = vsub.s32 %v735, %v737
        %v739 = vrot.slane %v731, %v738
        %v741 = vunpack.c.l.s4 1983009808
        %v742 = vunpack.c.0.s8 %v741
        %v743 = vlaneseq
        %v744 = vshrl.u32 %v743, 7
        %v745 = vsub.s32 %v742, %v744
        %v746 = vrot.slane %v732, %v745
        %v747 = vcombine.low %v739, %v746
        %v748 = vcombine.low %v621, %v625
        %v749 = vcombine.low %v629, %v633
        %v751 = vunpack.c.l.s4 1983009808
        %v752 = vunpack.c.0.s8 %v751
        %v753 = vlaneseq
        %v754 = vshrl.u32 %v753, 7
        %v755 = vsub.s32 %v752, %v754
        %v756 = vrot.slane %v748, %v755
        %v758 = vunpack.c.l.s4 1983009808
        %v759 = vunpack.c.0.s8 %v758
        %v760 = vlaneseq
        %v761 = vshrl.u32 %v760, 7
        %v762 = vsub.s32 %v759, %v761
        %v763 = vrot.slane %v749, %v762
        %v764 = vcombine.low %v756, %v763
        %v765 = vcombine.low %v637, %v641
        %v766 = vcombine.low %v645, %v649
        %v768 = vunpack.c.l.s4 1983009808
        %v769 = vunpack.c.0.s8 %v768
        %v770 = vlaneseq
        %v771 = vshrl.u32 %v770, 7
        %v772 = vsub.s32 %v769, %v771
        %v773 = vrot.slane %v765, %v772
        %v775 = vunpack.c.l.s4 1983009808
        %v776 = vunpack.c.0.s8 %v775
        %v777 = vlaneseq
        %v778 = vshrl.u32 %v777, 7
        %v779 = vsub.s32 %v776, %v778
        %v780 = vrot.slane %v766, %v779
        %v781 = vcombine.low %v773, %v780
        %v782 = vcombine.low %v653, %v657
        %v783 = vcombine.low %v661, %v665
        %v785 = vunpack.c.l.s4 1983009808
        %v786 = vunpack.c.0.s8 %v785
        %v787 = vlaneseq
        %v788 = vshrl.u32 %v787, 7
        %v789 = vsub.s32 %v786, %v788
        %v790 = vrot.slane %v782, %v789
        %v792 = vunpack.c.l.s4 1983009808
        %v793 = vunpack.c.0.s8 %v792
        %v794 = vlaneseq
        %v795 = vshrl.u32 %v794, 7
        %v796 = vsub.s32 %v793, %v795
        %v797 = vrot.slane %v783, %v796
        %v798 = vcombine.low %v790, %v797
        %v799 = vcombine.low %v669, %v673
        %v800 = vcombine.low %v677, %v681
        %v802 = vunpack.c.l.s4 1983009808
        %v803 = vunpack.c.0.s8 %v802
        %v804 = vlaneseq
        %v805 = vshrl.u32 %v804, 7
        %v806 = vsub.s32 %v803, %v805
        %v807 = vrot.slane %v799, %v806
        %v809 = vunpack.c.l.s4 1983009808
        %v810 = vunpack.c.0.s8 %v809
        %v811 = vlaneseq
        %v812 = vshrl.u32 %v811, 7
        %v813 = vsub.s32 %v810, %v812
        %v814 = vrot.slane %v800, %v813
        %v815 = vcombine.low %v807, %v814
        %v816 = vcombine.low %v685, %v689
        %v817 = vcombine.low %v693, %v697
        %v819 = vunpack.c.l.s4 1983009808
        %v820 = vunpack.c.0.s8 %v819
        %v821 = vlaneseq
        %v822 = vshrl.u32 %v821, 7
        %v823 = vsub.s32 %v820, %v822
        %v824 = vrot.slane %v816, %v823
        %v826 = vunpack.c.l.s4 1983009808
        %v827 = vunpack.c.0.s8 %v826
        %v828 = vlaneseq
        %v829 = vshrl.u32 %v828, 7
        %v830 = vsub.s32 %v827, %v829
        %v831 = vrot.slane %v817, %v830
        %v832 = vcombine.low %v824, %v831
        %v833 = vcombine.low %v701, %v705
        %v834 = vcombine.low %v709, %v713
        %v836 = vunpack.c.l.s4 1983009808
        %v837 = vunpack.c.0.s8 %v836
        %v838 = vlaneseq
        %v839 = vshrl.u32 %v838, 7
        %v840 = vsub.s32 %v837, %v839
        %v841 = vrot.slane %v833, %v840
        %v843 = vunpack.c.l.s4 1983009808
        %v844 = vunpack.c.0.s8 %v843
        %v845 = vlaneseq
        %v846 = vshrl.u32 %v845, 7
        %v847 = vsub.s32 %v844, %v846
        %v848 = vrot.slane %v834, %v847
        %v849 = vcombine.low %v841, %v848
        %v858 = vadd.f32 %v570, %v730
        %v859 = vadd.f32 %v571, %v747
        %v860 = vadd.f32 %v572, %v764
        %v861 = vadd.f32 %v573, %v781
        %v862 = vadd.f32 %v574, %v798
        %v863 = vadd.f32 %v575, %v815
        %v864 = vadd.f32 %v576, %v832
        %v865 = vadd.f32 %v577, %v849
        %866 = vst [vmem:[%s277] sm:$0xff] %v858
        %867 = vst [vmem:[%s277 + $0x8] sm:$0xff] %v859
        %868 = vst [vmem:[%s277 + $0x10] sm:$0xff] %v860
        %869 = vst [vmem:[%s277 + $0x18] sm:$0xff] %v861
        %870 = vst [vmem:[%s277 + $0x20] sm:$0xff] %v862
        %871 = vst [vmem:[%s277 + $0x28] sm:$0xff] %v863
        %872 = vst [vmem:[%s277 + $0x30] sm:$0xff] %v864
        %873 = vst [vmem:[%s277 + $0x38] sm:$0xff] %v865
        %s874 = sand.u32 %s125, 1
        %s875 = scalar_lea.sflag [#allocation4], %s874
        %s876 = sand.u32 %s125, 1
        %s877 = smul.addr %s876, 64
        %s878 = scalar_lea.vmem [#allocation8], %s877
        // Predicated region
        $region45: #{tpu_custom_call.1} parent=31 // pred_check
          %p879 = pneg %p135
        $region46: #{tpu_custom_call.1} parent=31 // pred_check_branch
          %881 = sbr.rel (%p879) target = $region48
        $region47: #{tpu_custom_call.1} parent=31 // pred_region
          %s882 = smul.u32 32, %s27
          %s884 = ssub.s32 1024, 1024
          %885 = vsyncadd %s875, %s884
          %s886 = smul.addr %s28, 64
          %s887 = sadd.s32 %s882, %s886
          %s888 = smul.addr %s887, 32
          %s889 = scalar_lea.hbm %s3, %s888
          %s891 = sshll.u32 %s878, 4
          %s892 = int_to_ptr.vmem [resolvable:$true] %s891
          %894 = dma.vmem_to_hbm [thread:$0]  %s892, 1024, %s889, %s875
        $region48: #{tpu_custom_call.1} parent=31 // pred_fallthru
          _
      $region32: #{tpu_custom_call.1} parent=5 // pred_fallthru
        _
      %p895 = scmp.le.s32.totalorder 2, %s18
      // Predicated region
      $region49: #{tpu_custom_call.1} parent=5 // pred_check
        %p896 = pneg %p895
      $region50: #{tpu_custom_call.1} parent=5 // pred_check_branch
        %898 = sbr.rel (%p896) target = $region52
      $region51: #{tpu_custom_call.1} parent=5 // pred_region
        %s899 = ssub.s32 %s18, 2
        // Predicated region
        $region53: #{tpu_custom_call.1} parent=51 // pred_check
          %p900 = pneg %p141
        $region54: #{tpu_custom_call.1} parent=51 // pred_check_branch
          %902 = sbr.rel (%p900) target = $region56
        $region55: #{tpu_custom_call.1} parent=51 // pred_region
          %s903 = sand.u32 %s126, 1
          %s904 = scalar_lea.sflag [#allocation4], %s903
          %s905 = sand.u32 %s126, 1
          %s906 = smul.addr %s905, 64
          %s907 = scalar_lea.vmem [#allocation8], %s906
          %908 = dma.done %s904, 1024
        $region56: #{tpu_custom_call.1} parent=51 // pred_fallthru
          _
      $region52: #{tpu_custom_call.1} parent=5 // pred_fallthru
        _
    $region6: #{tpu_custom_call.1} parent=1 // loop_footer
      %s22 = sadd.s32 1, %s18
    $region7: #{tpu_custom_call.1} parent=1 // loop_footer_branch
      %17 = sbr.rel target = $region3
    $region8: #{tpu_custom_call.1} parent=1 // loop_exit
      _
    %909 = vsyncpa [#allocation3], 1
    %s910 = scalar_lea.sflag [#allocation3], 1
    %911 = vsyncpa %s910, 1
    %912 = vsyncpa [#allocation6], 1
    %s913 = scalar_lea.sflag [#allocation6], 1
    %914 = vsyncpa %s913, 1
    %915 = vsyncpa [#allocation4], 1
    %s916 = scalar_lea.sflag [#allocation4], 1
    %917 = vsyncpa %s916, 1

</llo_original>
